<compile_context>
chip_gen: v7x
topology: tpu7x:2x2x1
jax: 0.10.0
libtpu: 0.0.40
codegen_flags: <defaults>
</compile_context>

<pallas_src>
import functools

import jax
import jax.numpy as jnp
from jax.experimental import pallas as pl
from jax.experimental.pallas import tpu as pltpu


def _bias_add_kernel(y_ref, x_ref, o_ref):
    # y_ref/o_ref: (bm, n) VMEM tile; x_ref: (1, n) VMEM tile, resident across
    # the grid.  Single VPU elementwise add with sublane broadcast of x.
    o_ref[...] = y_ref[...] + x_ref[...]


def _bias_add_2d(y2: jax.Array, x2: jax.Array) -> jax.Array:
    """(B, n) + (1, n) -> (B, n) via a row-blocked Pallas kernel."""
    B, n = y2.shape

    # Row block: whole array when small (test case), 512-row tiles (multiple
    # of 8 sublanes, full lane extent) when scaled up.
    bm = B if B <= 1024 else 512
    grid = (pl.cdiv(B, bm),)

    return pl.pallas_call(
        _bias_add_kernel,
        out_shape=jax.ShapeDtypeStruct((B, n), y2.dtype),
        grid=grid,
        in_specs=[
            # y: one row-block per grid step.
            pl.BlockSpec((bm, n), lambda i: (i, 0)),
            # x: constant index_map -> DMA'd once, resident across the grid.
            pl.BlockSpec((1, n), lambda i: (0, 0)),
        ],
        out_specs=pl.BlockSpec((bm, n), lambda i: (i, 0)),
        # Reuse y's buffer for the output (effective only with donation).
        input_output_aliases={0: 0},
        compiler_params=pltpu.CompilerParams(
            dimension_semantics=("parallel",),
        ),
    )(y2, x2)


@functools.partial(jax.jit, donate_argnums=(0,))
def model_forward(y: jax.Array, x_param: jax.Array) -> jax.Array:
    """Equivalent of Model.forward: y + x_param with numpy-style broadcasting
    of the (n,) parameter over any leading dims of y."""
    assert x_param.ndim == 1, x_param.shape
    assert y.shape[-1] == x_param.shape[0], (y.shape, x_param.shape)
    assert y.dtype == x_param.dtype, (y.dtype, x_param.dtype)

    n = x_param.shape[0]
    orig_shape = y.shape

    # Collapse all leading dims into a row axis; (n,) becomes (1, n).
    y2 = y.reshape(-1, n) if y.ndim > 1 else y.reshape(1, n)
    x2 = x_param.reshape(1, n)

    out2 = _bias_add_2d(y2, x2)
    return out2.reshape(orig_shape)


if __name__ == "__main__":
    key = jax.random.PRNGKey(0)
    k_param, k_in, k_batch = jax.random.split(key, 3)

    # Deterministic "parameter" (self.x in the PyTorch module): shape (3,)
    x_param = jax.random.normal(k_param, (3,), dtype=jnp.float32)
    # Inputs: the module's own test shape (3,) and a broadcast/batched (4, 3).
    y = jax.random.normal(k_in, (3,), dtype=jnp.float32)
    y_batched = jax.random.normal(k_batch, (4, 3), dtype=jnp.float32)

    # Compute references BEFORE calling (y / y_batched buffers are donated).
    ref = y + x_param
    ref_batched = y_batched + x_param

    out = model_forward(y, x_param)
    jax.block_until_ready(out)
    out_batched = model_forward(y_batched, x_param)
    jax.block_until_ready(out_batched)

    assert jnp.allclose(out, ref, atol=1e-6), (out, ref)
    assert jnp.allclose(out_batched, ref_batched, atol=1e-6), (
        out_batched, ref_batched)

    print("KERNEL_OK")
</pallas_src>

<mosaic_0001>
module attributes {stable_mosaic.version = 11 : i64} {
  func.func @_bias_add_kernel(%arg0: i32, %arg1: memref<1x3xf32, #tpu.memory_space<vmem>>, %arg2: memref<1x3xf32, #tpu.memory_space<vmem>>, %arg3: memref<1x3xf32, #tpu.memory_space<vmem>>) attributes {dimension_semantics = [#tpu.dimension_semantics<parallel>], iteration_bounds = array<i64: 1>, scalar_prefetch = 0 : i64, scratch_operands = 0 : i64, tpu.core_type = #tpu.core_type<tc>, window_params = [{transform_indices = @transform_0, window_bounds = array<i64: 1, 3>}, {pipeline_mode = #tpu.pipeline_mode<synchronous>, transform_indices = @transform_1, window_bounds = array<i64: 1, 3>}, {transform_indices = @transform_2, window_bounds = array<i64: 1, 3>}]} {
    %c0 = arith.constant 0 : index
    %c0_0 = arith.constant 0 : index
    %0 = vector.load %arg1[%c0, %c0_0] : memref<1x3xf32, #tpu.memory_space<vmem>>, vector<1x3xf32>
    %c0_1 = arith.constant 0 : index
    %c0_2 = arith.constant 0 : index
    %1 = vector.load %arg2[%c0_1, %c0_2] : memref<1x3xf32, #tpu.memory_space<vmem>>, vector<1x3xf32>
    %2 = arith.addf %0, %1 : vector<1x3xf32>
    %c0_3 = arith.constant 0 : index
    %c0_4 = arith.constant 0 : index
    %3 = vector.load %arg3[%c0_3, %c0_4] : memref<1x3xf32, #tpu.memory_space<vmem>>, vector<1x3xf32>
    tpu.vector_store %arg3[%c0_3, %c0_4], %2 {strides = array<i32>} : memref<1x3xf32, #tpu.memory_space<vmem>>, vector<1x3xf32>,
    return
  }
  func.func @transform_0(%arg0: i32) -> (i32, i32) {
    %c0_i32 = arith.constant 0 : i32
    %c0_i32_0 = arith.constant 0 : i32
    return %arg0, %c0_i32 : i32, i32
  }
  func.func @transform_1(%arg0: i32) -> (i32, i32) {
    %c0_i32 = arith.constant 0 : i32
    %c0_i32_0 = arith.constant 0 : i32
    %c0_i32_1 = arith.constant 0 : i32
    return %c0_i32, %c0_i32_0 : i32, i32
  }
  func.func @transform_2(%arg0: i32) -> (i32, i32) {
    %c0_i32 = arith.constant 0 : i32
    %c0_i32_0 = arith.constant 0 : i32
    return %arg0, %c0_i32 : i32, i32
  }
}

</mosaic_0001>

<llo_original>
// kernel: model_forward.1
$region0: #{model_forward.1}
  #allocation0 [shape = 'u32[]', space=smem, size = 0x4, offset = 0x4, fixed_abs, tag = 'smem constant byte address 0x4 - core index']
  #allocation1 [shape = 'u32[144,128]{1,0:T(1,128)}', space=vmem, size = 0x12000, scoped, tag = 'internal scratch']
  %s0 = inlined_call_operand.vmem [shape: f32[1,3], index: 0, kind: input, shape index: {}, may-alias: {0,2}]
  %s1 = inlined_call_operand.vmem [shape: f32[1,3], index: 1, kind: input, shape index: {}]
  %s2 = inlined_call_operand.vmem [shape: f32[1,3], index: 2, kind: output, shape index: {}, may-alias: {0,2}]
  %s3 = sld [smem:[#allocation0]]
  $region18: #{model_forward.1} parent=0
    _
  %s5 = ssub.s32 1, %s3
  %s6 = scalar_select 0, %s5, %s3
  // Predicated region
  $region2: #{model_forward.1} parent=0 // pred_check
    _
  $region3: #{model_forward.1} parent=0 // pred_check_branch
    %8 = sbr.rel (0) target = $region5
  $region4: #{model_forward.1} parent=0 // pred_region
    _
  $region5: #{model_forward.1} parent=0 // pred_fallthru
    _
  // Predicated region
  $region6: #{model_forward.1} parent=0 // pred_check
    _
  $region7: #{model_forward.1} parent=0 // pred_check_branch
    %10 = sbr.rel (0) target = $region9
  $region8: #{model_forward.1} parent=0 // pred_region
    _
  $region9: #{model_forward.1} parent=0 // pred_fallthru
    _
  %v11 = vld [vmem:[%s0] sm:$0x1]
  %v12 = vld [vmem:[%s1] sm:$0x1]
  %v13 = vadd.f32 %v11, %v12
  %vm14 = vcmask 16384
  %15 = vst.msk [vmem:[%s2] sm:$0x1] %vm14, %v13
  // Predicated region
  $region10: #{model_forward.1} parent=0 // pred_check
    _
  $region11: #{model_forward.1} parent=0 // pred_check_branch
    %17 = sbr.rel (0) target = $region13
  $region12: #{model_forward.1} parent=0 // pred_region
    _
  $region13: #{model_forward.1} parent=0 // pred_fallthru
    _
  // Predicated region
  $region14: #{model_forward.1} parent=0 // pred_check
    _
  $region15: #{model_forward.1} parent=0 // pred_check_branch
    %19 = sbr.rel (0) target = $region17
  $region16: #{model_forward.1} parent=0 // pred_region
    _
  $region17: #{model_forward.1} parent=0 // pred_fallthru
    _

</llo_original>
